<compile_context>
chip_gen: v6e
topology: v6e:2x2x1
jax: 0.10.0
libtpu: 0.0.40
codegen_flags: <defaults>
</compile_context>

<pallas_src>
import functools

import jax
import jax.numpy as jnp
from jax.experimental import pallas as pl
from jax.experimental.pallas import tpu as pltpu


def _triplet_softmax_kernel(s_ref, d_ref, o_ref, *, n_neg, n_rows_total,
                            use_complement, loop_unroll):
    i = pl.program_id(0)
    tm, n = s_ref.shape                                     # (TM, N) row slab

    s = s_ref[...].astype(jnp.float32)

    # Numerically-stable exp: per-row max shift (exact for this loss).
    row_max = jnp.max(s, axis=1, keepdims=True)             # (TM, 1)   XLU

    # Index helpers: one (TM, N) column iota + (TM, 1) vectors only.
    lrow = jax.lax.broadcasted_iota(jnp.int32, (tm, 1), 0)  # (TM, 1)
    grow = lrow + i * tm                                    # global row index
    valid = grow < n_rows_total                             # (TM, 1)
    col = jax.lax.broadcasted_iota(jnp.int32, (tm, n), 1)   # (TM, N)
    kill = (col == grow) | jnp.logical_not(valid)           # diag or padded row

    # Positive similarity from the (TM, TM) diagonal window of s.
    d = d_ref[...].astype(jnp.float32)                      # (TM, TM)
    dcol = jax.lax.broadcasted_iota(jnp.int32, (tm, tm), 1)
    diag_val = jnp.sum(jnp.where(dcol == lrow, d, 0.0), axis=1, keepdims=True)
    pos = jnp.exp(diag_val - row_max)                       # (TM, 1)
    pos = jnp.where(valid, pos, 1.0)                        # keep padded rows finite

    e = jnp.exp(s - row_max)          # single consumer below -> fused, no extra slab
    k_full = n_rows_total - 1
    zero = jnp.zeros((tm, 1), jnp.float32)

    if n_neg <= 0:
        neg = zero
    elif n_neg >= k_full:
        # "All negatives": a single lane reduction.
        neg = jnp.sum(jnp.where(kill, 0.0, e), axis=1, keepdims=True)
    elif use_complement:
        # neg = (full off-diagonal sum) - (sum of the n_rm smallest candidates).
        n_rm = k_full - n_neg
        work = jnp.where(kill, 2.0, e)       # values in [0,1]; 2.0 == "removed"
        # Every valid row has exactly one killed entry (its diagonal) worth 2.0.
        offdiag_sum = jnp.sum(work, axis=1, keepdims=True) - 2.0

        def body(_, carry):
            w, ssum, removed = carry
            m = jnp.min(w, axis=1, keepdims=True)            # 1 XLU reduce
            is_m = w == m                                     # 1 VPU compare
            cnt = jnp.sum(is_m.astype(jnp.float32), axis=1, keepdims=True)
            take = jnp.minimum(cnt, jnp.maximum(float(n_rm) - removed, 0.0))
            ssum = ssum + take * m
            removed = removed + take
            w = jnp.where(is_m, 2.0, w)                       # 1 VPU select
            return w, ssum, removed

        _, ssum, _ = jax.lax.fori_loop(0, n_rm, body, (work, zero, zero),
                                       unroll=loop_unroll)
        neg = offdiag_sum - ssum
    else:
        # Counted max-extraction of the n_neg largest candidates.
        work = jnp.where(kill, 0.0, e)       # exp(.) >= 0, so 0 is a safe sentinel

        def body(_, carry):
            w, acc, taken = carry
            m = jnp.max(w, axis=1, keepdims=True)             # 1 XLU reduce
            is_m = w == m
            cnt = jnp.sum(is_m.astype(jnp.float32), axis=1, keepdims=True)
            take = jnp.minimum(cnt, jnp.maximum(float(n_neg) - taken, 0.0))
            acc = acc + take * m
            taken = taken + take
            w = jnp.where(is_m, 0.0, w)
            return w, acc, taken

        _, neg, _ = jax.lax.fori_loop(0, n_neg, body, (work, zero, zero),
                                      unroll=loop_unroll)

    # loss_i = -log(pos / (pos + neg)) = log(1 + neg / pos);  mask padded rows.
    loss = jnp.where(valid, jnp.log(1.0 + neg / pos), 0.0)    # (TM, 1)

    # Lane-dense per-tile partial sum (all 128 lanes carry the same value).
    tile_sum = jnp.sum(loss)
    o_ref[...] = jnp.broadcast_to(tile_sum, (1, 128)).astype(jnp.float32)


def _vmem_budgets():
    """Per-generation (block_budget_bytes, vmem_limit_bytes)."""
    try:
        cap = pltpu.get_tpu_info().vmem_capacity_bytes
    except Exception:
        cap = 64 * 1024 * 1024                       # unknown -> conservative
    if cap <= 64 * 1024 * 1024:                      # v7x-class: 64 MiB per TC
        return 2 * 1024 * 1024, 48 * 1024 * 1024
    return 8 * 1024 * 1024, 100 * 1024 * 1024        # v5e / v6e: 128 MiB physical


def _choose_tile_rows(n, itemsize, block_budget_bytes):
    """TM for the (TM, N) row slab.

    Either the full N (small problems) or a multiple of 128 so the (TM, TM)
    diagonal-window BlockSpec satisfies lane tiling; capped near N/4 so the
    parallel grid axis has several steps (feeds both TensorCores on v7x)."""
    if n <= 256:
        return n
    tm = block_budget_bytes // max(1, n * itemsize)
    tm = min(tm, -(-n // 4))                         # aim for >= 4 tiles
    tm = max(128, (tm // 128) * 128)
    return min(tm, n)


def triplet_softmax_loss(s, n_neg, margin=0.0, eps=1e-8):
    """Pallas TPU implementation of TripletSoftmaxLoss.forward.

    s: [N, N] pairwise similarity matrix, s[i, j] = s(x_i, y_j).
    Returns the scalar mean loss (float32). `margin` and `eps` are accepted for
    API parity but, exactly as in the reference forward, are unused.
    """
    n1, n2 = s.shape
    assert n1 == n2
    n = n1
    assert 0 <= n_neg <= n - 1
    del margin, eps                                   # unused by the reference forward

    block_budget, vmem_limit = _vmem_budgets()
    tm = _choose_tile_rows(n, jnp.dtype(s.dtype).itemsize, block_budget)
    num_tiles = pl.cdiv(n, tm)

    k_full = n - 1
    use_complement = (0 < n_neg < k_full) and (n_neg > k_full // 2)
    k_iters = (k_full - n_neg) if use_complement else n_neg
    loop_unroll = True if k_iters <= 8 else 2

    kernel = functools.partial(
        _triplet_softmax_kernel,
        n_neg=n_neg, n_rows_total=n,
        use_complement=use_complement, loop_unroll=loop_unroll)

    partials = pl.pallas_call(
        kernel,
        out_shape=jax.ShapeDtypeStruct((num_tiles, 128), jnp.float32),
        grid=(num_tiles,),
        in_specs=[
            pl.BlockSpec((tm, n), lambda i: (i, 0)),      # full row slab
            pl.BlockSpec((tm, tm), lambda i: (i, i)),     # diagonal window of s
        ],
        out_specs=pl.BlockSpec((1, 128), lambda i: (i, 0)),
        compiler_params=pltpu.CompilerParams(
            dimension_semantics=("parallel",),
            vmem_limit_bytes=vmem_limit,
        ),
    )(s, s)

    # Every lane of a partial row holds the same tile sum; finish the mean here.
    return jnp.sum(partials[:, 0]) / n


def _reference(s, n_neg):
    """Pure-JAX reference mirroring the PyTorch forward."""
    N = s.shape[0]
    e = jnp.exp(s.astype(jnp.float32))
    pos = jnp.diag(e)
    off = e[~jnp.eye(N, dtype=bool)].reshape(N, N - 1)
    neg = jnp.sum(jax.lax.top_k(off, n_neg)[0], axis=1)
    return jnp.mean(-jnp.log(pos / (pos + neg)))


if __name__ == "__main__":
    # Module hyper-params (margin/eps are unused by forward).
    N = 8

    key = jax.random.PRNGKey(0)
    s = jax.random.normal(key, (N, N), dtype=jnp.float32)

    # Exercise all three static paths: max-extraction, complement, all-negatives.
    for n_neg in (3, 6, 7):
        loss = triplet_softmax_loss(s, n_neg)
        loss = jax.block_until_ready(loss)
        ref = _reference(s, n_neg)
        assert jnp.allclose(loss, ref, atol=1e-5, rtol=1e-5), (n_neg, loss, ref)

    print("KERNEL_OK")
</pallas_src>

<mosaic_0001>
module attributes {stable_mosaic.version = 11 : i64} {
  func.func @_triplet_softmax_kernel(%arg0: i32, %arg1: memref<8x8xf32, #tpu.memory_space<vmem>>, %arg2: memref<8x8xf32, #tpu.memory_space<vmem>>, %arg3: memref<1x128xf32, #tpu.memory_space<vmem>>) attributes {dimension_semantics = [#tpu.dimension_semantics<parallel>], iteration_bounds = array<i64: 1>, scalar_prefetch = 0 : i64, scratch_operands = 0 : i64, tpu.core_type = #tpu.core_type<tc>, window_params = [{transform_indices = @transform_0, window_bounds = array<i64: 8, 8>}, {transform_indices = @transform_1, window_bounds = array<i64: 8, 8>}, {transform_indices = @transform_2, window_bounds = array<i64: 1, 128>}]} {
    %c0 = arith.constant 0 : index
    %c0_0 = arith.constant 0 : index
    %0 = vector.load %arg1[%c0, %c0_0] : memref<8x8xf32, #tpu.memory_space<vmem>>, vector<8x8xf32>
    %cst = arith.constant dense<0xFF800000> : vector<8xf32>
    %1 = vector.multi_reduction <maximumf>, %0, %cst [1] : vector<8x8xf32> to vector<8xf32>
    %2 = vector.shape_cast %1 : vector<8xf32> to vector<8x1xf32>
    %3 = tpu.iota {dimensions = array<i32: 0>} : vector<8x1xi32>
    %c8_i32 = arith.constant 8 : i32
    %4 = arith.muli %arg0, %c8_i32 : i32
    %5 = vector.broadcast %4 : i32 to vector<8x1xi32>
    %6 = arith.addi %3, %5 : vector<8x1xi32>
    %c8_i32_1 = arith.constant 8 : i32
    %7 = vector.broadcast %c8_i32_1 : i32 to vector<8x1xi32>
    %8 = arith.cmpi slt, %6, %7 : vector<8x1xi32>
    %9 = tpu.iota {dimensions = array<i32: 1>} : vector<8x8xi32>
    %10 = vector.broadcast %6 : vector<8x1xi32> to vector<8x8xi32>
    %11 = arith.cmpi eq, %9, %10 : vector<8x8xi32>
    %cst_2 = arith.constant dense<true> : vector<8x1xi1>
    %12 = arith.xori %8, %cst_2 : vector<8x1xi1>
    %13 = vector.broadcast %12 : vector<8x1xi1> to vector<8x8xi1>
    %14 = arith.ori %11, %13 : vector<8x8xi1>
    %c0_3 = arith.constant 0 : index
    %c0_4 = arith.constant 0 : index
    %15 = vector.load %arg2[%c0_3, %c0_4] : memref<8x8xf32, #tpu.memory_space<vmem>>, vector<8x8xf32>
    %16 = tpu.iota {dimensions = array<i32: 1>} : vector<8x8xi32>
    %17 = vector.broadcast %3 : vector<8x1xi32> to vector<8x8xi32>
    %18 = arith.cmpi eq, %16, %17 : vector<8x8xi32>
    %cst_5 = arith.constant 0.000000e+00 : f32
    %19 = vector.broadcast %cst_5 : f32 to vector<8x8xf32>
    %20 = arith.select %18, %15, %19 : vector<8x8xi1>, vector<8x8xf32>
    %cst_6 = arith.constant dense<0.000000e+00> : vector<8xf32>
    %21 = vector.multi_reduction <add>, %20, %cst_6 [1] : vector<8x8xf32> to vector<8xf32>
    %22 = vector.shape_cast %21 : vector<8xf32> to vector<8x1xf32>
    %23 = arith.subf %22, %2 : vector<8x1xf32>
    %24 = math.exp %23 : vector<8x1xf32>
    %cst_7 = arith.constant 1.000000e+00 : f32
    %25 = vector.broadcast %cst_7 : f32 to vector<8x1xf32>
    %26 = arith.select %8, %24, %25 : vector<8x1xi1>, vector<8x1xf32>
    %27 = vector.broadcast %2 : vector<8x1xf32> to vector<8x8xf32>
    %28 = arith.subf %0, %27 : vector<8x8xf32>
    %29 = math.exp %28 : vector<8x8xf32>
    %cst_8 = arith.constant 0.000000e+00 : f32
    %30 = vector.broadcast %cst_8 : f32 to vector<8x1xf32>
    %cst_9 = arith.constant 0.000000e+00 : f32
    %31 = vector.broadcast %cst_9 : f32 to vector<8x8xf32>
    %32 = arith.select %14, %31, %29 : vector<8x8xi1>, vector<8x8xf32>
    %c0_i32 = arith.constant 0 : i32
    %cst_10 = arith.constant dense<0xFF800000> : vector<8xf32>
    %33 = vector.multi_reduction <maximumf>, %32, %cst_10 [1] : vector<8x8xf32> to vector<8xf32>
    %34 = vector.shape_cast %33 : vector<8xf32> to vector<8x1xf32>
    %35 = vector.broadcast %34 : vector<8x1xf32> to vector<8x8xf32>
    %36 = arith.cmpf oeq, %32, %35 : vector<8x8xf32>
    %37 = arith.extui %36 : vector<8x8xi1> to vector<8x8xi32>
    %38 = arith.sitofp %37 : vector<8x8xi32> to vector<8x8xf32>
    %cst_11 = arith.constant dense<0.000000e+00> : vector<8xf32>
    %39 = vector.multi_reduction <add>, %38, %cst_11 [1] : vector<8x8xf32> to vector<8xf32>
    %40 = vector.shape_cast %39 : vector<8xf32> to vector<8x1xf32>
    %cst_12 = arith.constant 3.000000e+00 : f32
    %41 = vector.broadcast %cst_12 : f32 to vector<8x1xf32>
    %42 = arith.subf %41, %30 : vector<8x1xf32>
    %cst_13 = arith.constant 0.000000e+00 : f32
    %43 = vector.broadcast %cst_13 : f32 to vector<8x1xf32>
    %44 = arith.maximumf %42, %43 : vector<8x1xf32>
    %45 = arith.minimumf %40, %44 : vector<8x1xf32>
    %46 = arith.mulf %45, %34 : vector<8x1xf32>
    %47 = arith.addf %30, %46 : vector<8x1xf32>
    %48 = arith.addf %30, %45 : vector<8x1xf32>
    %cst_14 = arith.constant 0.000000e+00 : f32
    %49 = vector.broadcast %cst_14 : f32 to vector<8x8xf32>
    %50 = arith.select %36, %49, %32 : vector<8x8xi1>, vector<8x8xf32>
    %c1_i32 = arith.constant 1 : i32
    %cst_15 = arith.constant dense<0xFF800000> : vector<8xf32>
    %51 = vector.multi_reduction <maximumf>, %50, %cst_15 [1] : vector<8x8xf32> to vector<8xf32>
    %52 = vector.shape_cast %51 : vector<8xf32> to vector<8x1xf32>
    %53 = vector.broadcast %52 : vector<8x1xf32> to vector<8x8xf32>
    %54 = arith.cmpf oeq, %50, %53 : vector<8x8xf32>
    %55 = arith.extui %54 : vector<8x8xi1> to vector<8x8xi32>
    %56 = arith.sitofp %55 : vector<8x8xi32> to vector<8x8xf32>
    %cst_16 = arith.constant dense<0.000000e+00> : vector<8xf32>
    %57 = vector.multi_reduction <add>, %56, %cst_16 [1] : vector<8x8xf32> to vector<8xf32>
    %58 = vector.shape_cast %57 : vector<8xf32> to vector<8x1xf32>
    %cst_17 = arith.constant 3.000000e+00 : f32
    %59 = vector.broadcast %cst_17 : f32 to vector<8x1xf32>
    %60 = arith.subf %59, %48 : vector<8x1xf32>
    %cst_18 = arith.constant 0.000000e+00 : f32
    %61 = vector.broadcast %cst_18 : f32 to vector<8x1xf32>
    %62 = arith.maximumf %60, %61 : vector<8x1xf32>
    %63 = arith.minimumf %58, %62 : vector<8x1xf32>
    %64 = arith.mulf %63, %52 : vector<8x1xf32>
    %65 = arith.addf %47, %64 : vector<8x1xf32>
    %66 = arith.addf %48, %63 : vector<8x1xf32>
    %cst_19 = arith.constant 0.000000e+00 : f32
    %67 = vector.broadcast %cst_19 : f32 to vector<8x8xf32>
    %68 = arith.select %54, %67, %50 : vector<8x8xi1>, vector<8x8xf32>
    %c2_i32 = arith.constant 2 : i32
    %cst_20 = arith.constant dense<0xFF800000> : vector<8xf32>
    %69 = vector.multi_reduction <maximumf>, %68, %cst_20 [1] : vector<8x8xf32> to vector<8xf32>
    %70 = vector.shape_cast %69 : vector<8xf32> to vector<8x1xf32>
    %71 = vector.broadcast %70 : vector<8x1xf32> to vector<8x8xf32>
    %72 = arith.cmpf oeq, %68, %71 : vector<8x8xf32>
    %73 = arith.extui %72 : vector<8x8xi1> to vector<8x8xi32>
    %74 = arith.sitofp %73 : vector<8x8xi32> to vector<8x8xf32>
    %cst_21 = arith.constant dense<0.000000e+00> : vector<8xf32>
    %75 = vector.multi_reduction <add>, %74, %cst_21 [1] : vector<8x8xf32> to vector<8xf32>
    %76 = vector.shape_cast %75 : vector<8xf32> to vector<8x1xf32>
    %cst_22 = arith.constant 3.000000e+00 : f32
    %77 = vector.broadcast %cst_22 : f32 to vector<8x1xf32>
    %78 = arith.subf %77, %66 : vector<8x1xf32>
    %cst_23 = arith.constant 0.000000e+00 : f32
    %79 = vector.broadcast %cst_23 : f32 to vector<8x1xf32>
    %80 = arith.maximumf %78, %79 : vector<8x1xf32>
    %81 = arith.minimumf %76, %80 : vector<8x1xf32>
    %82 = arith.mulf %81, %70 : vector<8x1xf32>
    %83 = arith.addf %65, %82 : vector<8x1xf32>
    %84 = arith.addf %66, %81 : vector<8x1xf32>
    %cst_24 = arith.constant 0.000000e+00 : f32
    %85 = vector.broadcast %cst_24 : f32 to vector<8x8xf32>
    %86 = arith.select %72, %85, %68 : vector<8x8xi1>, vector<8x8xf32>
    %87 = arith.divf %83, %26 : vector<8x1xf32>
    %cst_25 = arith.constant 1.000000e+00 : f32
    %88 = vector.broadcast %cst_25 : f32 to vector<8x1xf32>
    %89 = arith.addf %88, %87 : vector<8x1xf32>
    %90 = math.log %89 : vector<8x1xf32>
    %cst_26 = arith.constant 0.000000e+00 : f32
    %91 = vector.broadcast %cst_26 : f32 to vector<8x1xf32>
    %92 = arith.select %8, %90, %91 : vector<8x1xi1>, vector<8x1xf32>
    %93 = vector.shape_cast %92 : vector<8x1xf32> to vector<1x8x1xf32>
    %cst_27 = arith.constant dense<0.000000e+00> : vector<1xf32>
    %94 = vector.multi_reduction <add>, %93, %cst_27 [1, 2] : vector<1x8x1xf32> to vector<1xf32>
    %95 = vector.shape_cast %94 : vector<1xf32> to vector<1x1x1xf32>
    %96 = vector.extract %95[0, 0, 0] : f32 from vector<1x1x1xf32>
    %97 = vector.broadcast %96 : f32 to vector<1x128xf32>
    %c0_28 = arith.constant 0 : index
    %c0_29 = arith.constant 0 : index
    %98 = vector.load %arg3[%c0_28, %c0_29] : memref<1x128xf32, #tpu.memory_space<vmem>>, vector<1x128xf32>
    tpu.vector_store %arg3[%c0_28, %c0_29], %97 {strides = array<i32>} : memref<1x128xf32, #tpu.memory_space<vmem>>, vector<1x128xf32>,
    return
  }
  func.func @transform_0(%arg0: i32) -> (i32, i32) {
    %c0_i32 = arith.constant 0 : i32
    %c0_i32_0 = arith.constant 0 : i32
    return %arg0, %c0_i32 : i32, i32
  }
  func.func @transform_1(%arg0: i32) -> (i32, i32) {
    %c0_i32 = arith.constant 0 : i32
    return %arg0, %arg0 : i32, i32
  }
  func.func @transform_2(%arg0: i32) -> (i32, i32) {
    %c0_i32 = arith.constant 0 : i32
    %c0_i32_0 = arith.constant 0 : i32
    return %arg0, %c0_i32 : i32, i32
  }
}

</mosaic_0001>

<llo_original>
// kernel: tpu_custom_call.1
$region0: #{tpu_custom_call.1}
  #allocation0 [shape = 'u32[]', space=smem, size = 0x4, offset = 0x4, fixed_abs, tag = 'smem constant byte address 0x4 - core index']
  #allocation1 [shape = 'u32[144,128]{1,0:T(1,128)}', space=vmem, size = 0x12000, scoped, tag = 'internal scratch']
  %s0 = inlined_call_operand.hbm [shape: f32[8,8], index: 0, kind: input, shape index: {}]
  %s1 = inlined_call_operand.hbm [shape: f32[8,8], index: 1, kind: input, shape index: {}]
  %s2 = inlined_call_operand.hbm [shape: f32[1,128], index: 2, kind: output, shape index: {}]
  %s3 = sld [smem:[#allocation0]]
  $region26: #{tpu_custom_call.1} parent=0
    _
  %s5 = ssub.s32 1, %s3
  %s6 = scalar_select 0, %s5, %s3
  $region1: #{tpu_custom_call.1} parent=0
    #allocation2 [shape = 'u8[4096]{0}', space=vmem, size = 0x1000, scoped, tag = 'input window, operand 0, single buffered']
    #allocation3 [shape = 's32[1]{0}', space=sflag, size = 0x4, scoped, tag = 'scoped memory for tpu_custom_call.1']
    #allocation4 [shape = 's32[1]{0}', space=sflag, size = 0x4, scoped, tag = 'scoped memory for tpu_custom_call.1']
    #allocation5 [shape = 'u8[4096]{0}', space=vmem, size = 0x1000, scoped, tag = 'input window, operand 1, single buffered']
    #allocation6 [shape = 's32[1]{0}', space=sflag, size = 0x4, scoped, tag = 'scoped memory for tpu_custom_call.1']
    #allocation7 [shape = 'u8[512]{0}', space=vmem, size = 0x400, scoped, tag = 'output window, operand 0, single buffered']
    %7 = vsyncpa [#allocation3], 0
    %8 = vsyncpa [#allocation6], 0
    %9 = vsyncpa [#allocation4], 0
    // Predicated region
    $region2: #{tpu_custom_call.1} parent=1 // pred_check
      _
    $region3: #{tpu_custom_call.1} parent=1 // pred_check_branch
      %11 = sbr.rel (0) target = $region5
    $region4: #{tpu_custom_call.1} parent=1 // pred_region
      %s13 = ssub.s32 128, 128
      %14 = vsyncadd [#allocation3], %s13
      %s16 = sshll.u32 [#allocation2], 4
      %s17 = int_to_ptr.vmem [resolvable:$true] %s16
      %19 = dma.hbm_to_vmem [thread:$0]  %s0, 128, %s17, [#allocation3]
    $region5: #{tpu_custom_call.1} parent=1 // pred_fallthru
      _
    // Predicated region
    $region6: #{tpu_custom_call.1} parent=1 // pred_check
      _
    $region7: #{tpu_custom_call.1} parent=1 // pred_check_branch
      %21 = sbr.rel (0) target = $region9
    $region8: #{tpu_custom_call.1} parent=1 // pred_region
      %s23 = ssub.s32 128, 128
      %24 = vsyncadd [#allocation6], %s23
      %s26 = sshll.u32 [#allocation5], 4
      %s27 = int_to_ptr.vmem [resolvable:$true] %s26
      %29 = dma.hbm_to_vmem [thread:$0]  %s1, 128, %s27, [#allocation6]
    $region9: #{tpu_custom_call.1} parent=1 // pred_fallthru
      _
    // Predicated region
    $region10: #{tpu_custom_call.1} parent=1 // pred_check
      _
    $region11: #{tpu_custom_call.1} parent=1 // pred_check_branch
      %31 = sbr.rel (0) target = $region13
    $region12: #{tpu_custom_call.1} parent=1 // pred_region
      %32 = dma.done [#allocation3], 128
    $region13: #{tpu_custom_call.1} parent=1 // pred_fallthru
      _
    // Predicated region
    $region14: #{tpu_custom_call.1} parent=1 // pred_check
      _
    $region15: #{tpu_custom_call.1} parent=1 // pred_check_branch
      %34 = sbr.rel (0) target = $region17
    $region16: #{tpu_custom_call.1} parent=1 // pred_region
      %35 = dma.done [#allocation6], 128
    $region17: #{tpu_custom_call.1} parent=1 // pred_fallthru
      _
    %v36 = vld [vmem:[#allocation2] sm:$0xff]
    %vm37 = vcmask 64512
    %v38 = vsel %vm37, %v36, -inf
    %39 = vmax.xlane.f32.xlu0 %v38
    %v40 = vpop.xlane.xlu0 %39
    %v41 = vlaneseq
    %v42 = vshrl.u32 %v41, 7
    %s43 = smul.u32 0, 8
    %v44 = vstv %s43
    %v45 = vadd.s32 %v42, %v44
    %vm46 = vcmp.lt.s32.totalorder %v45, 8
    %v47 = vlaneseq
    %v48 = vand.u32 %v47, 127
    %vm49 = vcmp.eq.s32.totalorder %v48, %v45
    %vm50 = vmxor %vm46, 1
    %v51 = vsel %vm50, 1, 0
    %vm52 = vcmp.eq.s32.totalorder %v51, 1
    %vm53 = vmor %vm49, %vm52
    %v54 = vld [vmem:[#allocation5] sm:$0xff]
    %vm55 = vcmp.eq.s32.totalorder %v48, %v42
    %v56 = vsel %vm55, %v54, 0.0
    %v57 = vsel %vm37, %v56, 0.0
    %58 = vadd.xlane.f32.xlu0 %v57
    %v59 = vpop.xlane.xlu0 %58
    %v60 = vsub.f32 %v59, %v40
    %v61 = vmul.f32 %v60, 1.442695
    %v62 = vpow.pop %v61
    %v63 = vsel %vm46, %v62, 1.0
    %v64 = vsub.f32 %v36, %v40
    %v65 = vmul.f32 %v64, 1.442695
    %v66 = vpow.pop %v65
    %v67 = vsel %vm53, 0.0, %v66
    %v68 = vsel %vm37, %v67, -inf
    %69 = vmax.xlane.f32.xlu0 %v68
    %v70 = vpop.xlane.xlu0 %69
    %vm71 = vcmp.eq.f32.partialorder %v67, %v70
    %v72 = vsel %vm71, 1, 0
    %v73 = vcvt.s32.f32 %v72
    %v74 = vsel %vm37, %v73, 0.0
    %75 = vadd.xlane.f32.xlu0 %v74
    %v76 = vpop.xlane.xlu0 %75
    %v77 = vmin.f32 %v76, 3.0
    %v78 = vmul.f32 %v77, %v70
    %v79 = vadd.f32 %v78, 0.0
    %v80 = vadd.f32 %v77, 0.0
    %v81 = vsel %vm71, 0.0, %v67
    %v82 = vsel %vm37, %v81, -inf
    %83 = vmax.xlane.f32.xlu0 %v82
    %v84 = vpop.xlane.xlu0 %83
    %vm85 = vcmp.eq.f32.partialorder %v81, %v84
    %v86 = vsel %vm85, 1, 0
    %v87 = vcvt.s32.f32 %v86
    %v88 = vsel %vm37, %v87, 0.0
    %89 = vadd.xlane.f32.xlu0 %v88
    %v90 = vpop.xlane.xlu0 %89
    %v91 = vsub.f32 3.0, %v80
    %v92 = vmax.f32 %v91, 0.0
    %v93 = vmin.f32 %v90, %v92
    %v94 = vmul.f32 %v93, %v84
    %v95 = vadd.f32 %v79, %v94
    %v96 = vadd.f32 %v80, %v93
    %v97 = vsel %vm85, 0.0, %v81
    %v98 = vsel %vm37, %v97, -inf
    %99 = vmax.xlane.f32.xlu0 %v98
    %v100 = vpop.xlane.xlu0 %99
    %vm101 = vcmp.eq.f32.partialorder %v97, %v100
    %v102 = vsel %vm101, 1, 0
    %v103 = vcvt.s32.f32 %v102
    %v104 = vsel %vm37, %v103, 0.0
    %105 = vadd.xlane.f32.xlu0 %v104
    %v106 = vpop.xlane.xlu0 %105
    %v107 = vsub.f32 3.0, %v96
    %v108 = vmax.f32 %v107, 0.0
    %v109 = vmin.f32 %v106, %v108
    %v110 = vmul.f32 %v109, %v100
    %v111 = vadd.f32 %v95, %v110
    %v112 = vrcp.pop %v63
    %v113 = vmul.f32 %v111, %v112
    %v114 = vadd.f32 %v113, 1.0
    %v115 = vlog2.pop %v114
    %v116 = vmul.f32 %v115, 0.6931472
    %v117 = vsel %vm46, %v116, 0.0
    %vm118 = vcmask 7168
    %v119 = vsel %vm118, %v117, 0.0
    %120 = vadd.xlane.f32.xlu0 %v119
    %v121 = vpop.xlane.xlu0 %120
    %v122 = vrot.slane %v121, 4
    %v123 = vadd.f32 %v121, %v122
    %v124 = vrot.slane %v123, 2
    %v125 = vadd.f32 %v123, %v124
    %v126 = vrot.slane %v125, 1
    %v127 = vadd.f32 %v125, %v126
    %s128 = vtos %v127
    %v129 = vstv %s128
    %130 = vst [vmem:[#allocation7] sm:$0x1] %v129
    // Predicated region
    $region18: #{tpu_custom_call.1} parent=1 // pred_check
      _
    $region19: #{tpu_custom_call.1} parent=1 // pred_check_branch
      %132 = sbr.rel (0) target = $region21
    $region20: #{tpu_custom_call.1} parent=1 // pred_region
      %s134 = ssub.s32 16, 16
      %135 = vsyncadd [#allocation4], %s134
      %s137 = sshll.u32 [#allocation7], 4
      %s138 = int_to_ptr.vmem [resolvable:$true] %s137
      %140 = dma.vmem_to_hbm [thread:$0]  %s138, 16, %s2, [#allocation4]
    $region21: #{tpu_custom_call.1} parent=1 // pred_fallthru
      _
    // Predicated region
    $region22: #{tpu_custom_call.1} parent=1 // pred_check
      _
    $region23: #{tpu_custom_call.1} parent=1 // pred_check_branch
      %142 = sbr.rel (0) target = $region25
    $region24: #{tpu_custom_call.1} parent=1 // pred_region
      %143 = dma.done [#allocation4], 16
    $region25: #{tpu_custom_call.1} parent=1 // pred_fallthru
      _
    %144 = vsyncpa [#allocation3], 1
    %145 = vsyncpa [#allocation6], 1
    %146 = vsyncpa [#allocation4], 1

</llo_original>
